<compile_context>
chip_gen: v5e
topology: v5e:2x2
jax: 0.10.0
libtpu: 0.0.40
codegen_flags: <defaults>
</compile_context>

<pallas_src>
import functools

import jax
import jax.numpy as jnp
from jax.experimental import pallas as pl
from jax.experimental.pallas import tpu as pltpu


_IGNORE_INDEX = -1
_MAX_TILE_L = 32 * 1024          # 32768 lanes already saturates HBM roofline


def _vmem_capacity_bytes():
    """Per-core VMEM capacity, with a conservative (v7x-class) fallback."""
    try:
        return int(pltpu.get_tpu_info().vmem_capacity_bytes)
    except Exception:
        return 64 * 1024 * 1024


def _round_up(a, b):
    return -(-a // b) * b


def _ce_kernel(x_ref, t_ref, sum_ref, cnt_ref, *,
               total_l, tile_l, l_per_chunk, needs_mask):
    """One (batch n, spatial chunk c, inner tile l) grid step.

    x_ref:   (1, C, TILE_L) logits tile (channels on the sublane axis).
    t_ref:   (1, 1, TILE_L) int32 targets (-1 == ignore).
    sum_ref: (1, 1, 1) f32 per-(n, chunk) loss sum   (revisited accumulator).
    cnt_ref: (1, 1, 1) i32 per-(n, chunk) valid count (revisited accumulator).
    """
    c = pl.program_id(1)
    l = pl.program_id(2)

    @pl.when(l == 0)
    def _():
        sum_ref[...] = jnp.zeros_like(sum_ref)
        cnt_ref[...] = jnp.zeros_like(cnt_ref)

    x = x_ref[0]                                   # (C, TILE_L)
    if x.dtype != jnp.bfloat16:                    # bf16 stays bf16 (v6e/v7x EUP)
        x = x.astype(jnp.float32)
    t = t_ref[0]                                   # (1, TILE_L) int32

    # Numerically-stable log-sum-exp over the channel axis (f32 accumulation).
    m = jnp.max(x, axis=0, keepdims=True)                          # (1, TILE_L)
    e = jnp.exp(x - m)                                             # (C, TILE_L)
    lse = (jnp.log(jnp.sum(e.astype(jnp.float32), axis=0, keepdims=True))
           + m.astype(jnp.float32))                                # (1, TILE_L)

    # Target logit via one-hot select; tiny (C, 1) iota broadcasts in the
    # compare so no full (C, TILE_L) int32 slab is ever materialized.
    cidx = jax.lax.broadcasted_iota(jnp.int32, (x.shape[0], 1), 0)  # (C, 1)
    x_t = jnp.sum(jnp.where(cidx == t, x, 0), axis=0,
                  keepdims=True).astype(jnp.float32)               # (1, TILE_L)

    valid = t != _IGNORE_INDEX                                     # (1, TILE_L)
    if needs_mask:
        # Ragged tail / redundant clamped chunk steps: mask columns past the
        # true spatial extent. Use `where` (not multiply) so garbage padded
        # lanes can never contribute.
        col = ((c * l_per_chunk + l) * tile_l
               + jax.lax.broadcasted_iota(jnp.int32, t.shape, 1))
        valid = jnp.logical_and(valid, col < total_l)

    # Per-step lane reduction (XLU) straight into the tiny resident output
    # block: -log p(target) = lse - x_target.
    step_sum = jnp.sum(jnp.where(valid, lse - x_t, 0.0),
                       axis=-1, keepdims=True)                     # (1, 1) f32
    step_cnt = jnp.sum(valid.astype(jnp.int32),
                       axis=-1, keepdims=True)                     # (1, 1) i32

    sum_ref[...] += step_sum.reshape(1, 1, 1)
    cnt_ref[...] += step_cnt.reshape(1, 1, 1)


@jax.jit
def cross_entropy_loss_2d(inputs, targets):
    """inputs: (N, C, H, W) float logits; targets: (N, H, W) int class ids.

    Returns mean NLL over pixels with target != -1, matching
    nn.NLLLoss2d(weight=None, size_average=True, ignore_index=-1) applied to
    F.log_softmax(inputs, dim=1).
    """
    N, C, H, W = inputs.shape
    L = H * W

    # Free (contiguous) reshapes: no transpose, no padding copies in HBM.
    x = inputs.reshape(N, C, L)
    t = targets.reshape(N, 1, L).astype(jnp.int32)

    # ---- Generation-aware VMEM budgets ------------------------------------
    vmem_cap = _vmem_capacity_bytes()
    if vmem_cap >= 100 * 1024 * 1024:        # v5e / v6e: 128 MiB VMEM
        tile_budget = 40 * 1024 * 1024
        vmem_limit = 96 * 1024 * 1024
    else:                                    # v7x: 64 MiB / TC (or unknown)
        tile_budget = 20 * 1024 * 1024
        vmem_limit = 48 * 1024 * 1024

    # ---- Sublane-aware tile sizing -----------------------------------------
    xb = jnp.dtype(inputs.dtype).itemsize
    cdt = jnp.bfloat16 if inputs.dtype == jnp.bfloat16 else jnp.float32
    cb = jnp.dtype(cdt).itemsize
    pack_x = max(8, 32 // xb)                # sublane pack of the input dtype
    pack_c = max(8, 32 // cb)                # sublane pack of the compute dtype
    c_in = _round_up(C, pack_x)
    c_tmp = _round_up(C, pack_c)
    # double-buffered (x + sublane-padded target) tiles
    #   + ~4 (C_pad, TILE_L) compute-dtype temporaries
    #   + a handful of (8, TILE_L) f32 row vectors
    bytes_per_col = 2 * (c_in * xb + 8 * 4) + 4 * c_tmp * cb + 6 * 8 * 4
    tile_l = tile_budget // bytes_per_col
    tile_l = max(128, min(_MAX_TILE_L, (tile_l // 128) * 128))

    # Prefer >= ~8 inner pipeline steps per batch element (hides the DMA
    # prologue / compute epilogue) but never shrink below 512 lanes.
    desired = _round_up(max(512, -(-L // 8)), 128)
    tile_l = min(tile_l, desired)

    if tile_l >= L:
        tile_l = L
        num_l = 1
    else:
        num_l = pl.cdiv(L, tile_l)

    # Megacore (v7x): split the spatial tiles into 2 "parallel" chunks so both
    # TensorCores get work even when N == 1. Harmless on single-TC chips.
    num_chunks = 2 if num_l >= 2 else 1
    l_per_chunk = -(-num_l // num_chunks)
    needs_mask = (num_chunks * l_per_chunk * tile_l) != L

    kernel = functools.partial(_ce_kernel, total_l=L, tile_l=tile_l,
                               l_per_chunk=l_per_chunk, needs_mask=needs_mask)

    def _sp_idx(n, c, l):
        # Clamp redundant steps of the last (possibly short) chunk onto a valid
        # tile; their columns are >= L so the in-kernel mask drops them.
        g = jnp.minimum(c * l_per_chunk + l, num_l - 1)
        return (n, 0, g)

    cost = pl.CostEstimate(
        flops=6 * N * C * L,
        transcendentals=N * C * L + N * L,
        bytes_accessed=N * C * L * xb + N * L * 4 + N * num_chunks * 8,
    )

    loss_sum, valid_cnt = pl.pallas_call(
        kernel,
        out_shape=(
            jax.ShapeDtypeStruct((N, num_chunks, 1), jnp.float32),
            jax.ShapeDtypeStruct((N, num_chunks, 1), jnp.int32),
        ),
        grid_spec=pltpu.PrefetchScalarGridSpec(
            num_scalar_prefetch=0,
            grid=(N, num_chunks, l_per_chunk),
            in_specs=[
                pl.BlockSpec((1, C, tile_l), _sp_idx),
                pl.BlockSpec((1, 1, tile_l), _sp_idx),
            ],
            out_specs=(
                pl.BlockSpec((1, 1, 1), lambda n, c, l: (n, c, 0)),
                pl.BlockSpec((1, 1, 1), lambda n, c, l: (n, c, 0)),
            ),
        ),
        compiler_params=pltpu.CompilerParams(
            dimension_semantics=("parallel", "parallel", "arbitrary"),
            vmem_limit_bytes=vmem_limit,
        ),
        cost_estimate=cost,
    )(x, t)

    total_sum = jnp.sum(loss_sum)
    total_cnt = jnp.sum(valid_cnt).astype(jnp.float32)
    # Note: all-ignored input gives 0/0 -> NaN, same as PyTorch's size_average.
    return (total_sum / total_cnt).astype(inputs.dtype)


def _reference(inputs, targets):
    # Pure-JAX reference of F.log_softmax(dim=1) + NLLLoss2d(ignore_index=-1).
    logp = jax.nn.log_softmax(inputs.astype(jnp.float32), axis=1)  # (N,C,H,W)
    t = targets.astype(jnp.int32)
    valid = t != -1
    t_safe = jnp.where(valid, t, 0)
    picked = jnp.take_along_axis(logp, t_safe[:, None, :, :], axis=1)[:, 0]
    nll = jnp.where(valid, -picked, 0.0)
    return jnp.sum(nll) / jnp.sum(valid.astype(jnp.float32))


if __name__ == "__main__":
    key = jax.random.PRNGKey(0)
    k1, k2, k3 = jax.random.split(key, 3)

    N, C, H, W = 2, 4, 16, 16
    inputs = jax.random.normal(k1, (N, C, H, W), dtype=jnp.float32)
    targets = jax.random.randint(k2, (N, H, W), 0, C, dtype=jnp.int32)
    # sprinkle some ignore_index (-1) pixels
    ignore_mask = jax.random.uniform(k3, (N, H, W)) < 0.1
    targets = jnp.where(ignore_mask, -1, targets)

    loss = cross_entropy_loss_2d(inputs, targets)
    jax.block_until_ready(loss)

    ref = _reference(inputs, targets)
    assert jnp.allclose(loss, ref, atol=1e-5, rtol=1e-5), (loss, ref)

    print("KERNEL_OK")
</pallas_src>

<mosaic_0001>
module attributes {stable_mosaic.version = 11 : i64} {
  func.func @_ce_kernel(%arg0: i32, %arg1: i32, %arg2: i32, %arg3: memref<1x4x256xf32, #tpu.memory_space<vmem>>, %arg4: memref<1x1x256xi32, #tpu.memory_space<vmem>>, %arg5: memref<1x1x1xf32, #tpu.memory_space<vmem>>, %arg6: memref<1x1x1xi32, #tpu.memory_space<vmem>>) attributes {dimension_semantics = [#tpu.dimension_semantics<parallel>, #tpu.dimension_semantics<parallel>, #tpu.dimension_semantics<arbitrary>], iteration_bounds = array<i64: 2, 1, 1>, scalar_prefetch = 0 : i64, scratch_operands = 0 : i64, tpu.core_type = #tpu.core_type<tc>, window_params = [{transform_indices = @transform_0, window_bounds = array<i64: 1, 4, 256>}, {transform_indices = @transform_1, window_bounds = array<i64: 1, 1, 256>}, {transform_indices = @transform_2, window_bounds = array<i64: 1, 1, 1>}, {transform_indices = @transform_3, window_bounds = array<i64: 1, 1, 1>}]} {
    %c0_i32 = arith.constant 0 : i32
    %0 = arith.cmpi eq, %arg2, %c0_i32 : i32
    %1 = arith.extui %0 : i1 to i32
    %c0_i32_0 = arith.constant 0 : i32
    %2 = arith.cmpi ne, %1, %c0_i32_0 : i32
    scf.if %2 {
      %cst_24 = arith.constant 0.000000e+00 : f32
      %43 = vector.broadcast %cst_24 : f32 to vector<1x1x1xf32>
      %c0_25 = arith.constant 0 : index
      %c0_26 = arith.constant 0 : index
      %c0_27 = arith.constant 0 : index
      %44 = vector.load %arg5[%c0_25, %c0_26, %c0_27] : memref<1x1x1xf32, #tpu.memory_space<vmem>>, vector<1x1x1xf32>
      tpu.vector_store %arg5[%c0_25, %c0_26, %c0_27], %43 {strides = array<i32>} : memref<1x1x1xf32, #tpu.memory_space<vmem>>, vector<1x1x1xf32>,
      %c0_i32_28 = arith.constant 0 : i32
      %45 = vector.broadcast %c0_i32_28 : i32 to vector<1x1x1xi32>
      %c0_29 = arith.constant 0 : index
      %c0_30 = arith.constant 0 : index
      %c0_31 = arith.constant 0 : index
      %46 = vector.load %arg6[%c0_29, %c0_30, %c0_31] : memref<1x1x1xi32, #tpu.memory_space<vmem>>, vector<1x1x1xi32>
      tpu.vector_store %arg6[%c0_29, %c0_30, %c0_31], %45 {strides = array<i32>} : memref<1x1x1xi32, #tpu.memory_space<vmem>>, vector<1x1x1xi32>,
    } else {
    }
    %c0 = arith.constant 0 : index
    %c0_1 = arith.constant 0 : index
    %c0_2 = arith.constant 0 : index
    %3 = vector.load %arg3[%c0, %c0_1, %c0_2] : memref<1x4x256xf32, #tpu.memory_space<vmem>>, vector<1x4x256xf32>
    %4 = vector.shape_cast %3 : vector<1x4x256xf32> to vector<4x256xf32>
    %c0_3 = arith.constant 0 : index
    %c0_4 = arith.constant 0 : index
    %c0_5 = arith.constant 0 : index
    %5 = vector.load %arg4[%c0_3, %c0_4, %c0_5] : memref<1x1x256xi32, #tpu.memory_space<vmem>>, vector<1x1x256xi32>
    %6 = vector.shape_cast %5 : vector<1x1x256xi32> to vector<1x256xi32>
    %cst = arith.constant dense<0xFF800000> : vector<256xf32>
    %7 = vector.multi_reduction <maximumf>, %4, %cst [0] : vector<4x256xf32> to vector<256xf32>
    %8 = vector.shape_cast %7 : vector<256xf32> to vector<1x256xf32>
    %9 = vector.broadcast %8 : vector<1x256xf32> to vector<4x256xf32>
    %10 = arith.subf %4, %9 : vector<4x256xf32>
    %11 = math.exp %10 : vector<4x256xf32>
    %cst_6 = arith.constant dense<0.000000e+00> : vector<256xf32>
    %12 = vector.multi_reduction <add>, %11, %cst_6 [0] : vector<4x256xf32> to vector<256xf32>
    %13 = vector.shape_cast %12 : vector<256xf32> to vector<1x256xf32>
    %14 = math.log %13 : vector<1x256xf32>
    %15 = arith.addf %14, %8 : vector<1x256xf32>
    %16 = tpu.iota {dimensions = array<i32: 0>} : vector<4x1xi32>
    %17 = vector.broadcast %16 : vector<4x1xi32> to vector<4x256xi32>
    %18 = vector.broadcast %6 : vector<1x256xi32> to vector<4x256xi32>
    %19 = arith.cmpi eq, %17, %18 : vector<4x256xi32>
    %c0_i32_7 = arith.constant 0 : i32
    %20 = arith.sitofp %c0_i32_7 : i32 to f32
    %21 = vector.broadcast %20 : f32 to vector<4x256xf32>
    %22 = arith.select %19, %4, %21 : vector<4x256xi1>, vector<4x256xf32>
    %cst_8 = arith.constant dense<0.000000e+00> : vector<256xf32>
    %23 = vector.multi_reduction <add>, %22, %cst_8 [0] : vector<4x256xf32> to vector<256xf32>
    %24 = vector.shape_cast %23 : vector<256xf32> to vector<1x256xf32>
    %c-1_i32 = arith.constant -1 : i32
    %25 = vector.broadcast %c-1_i32 : i32 to vector<1x256xi32>
    %26 = arith.cmpi ne, %6, %25 : vector<1x256xi32>
    %27 = arith.subf %15, %24 : vector<1x256xf32>
    %cst_9 = arith.constant 0.000000e+00 : f32
    %28 = vector.broadcast %cst_9 : f32 to vector<1x256xf32>
    %29 = arith.select %26, %27, %28 : vector<1x256xi1>, vector<1x256xf32>
    %cst_10 = arith.constant dense<0.000000e+00> : vector<1xf32>
    %30 = vector.multi_reduction <add>, %29, %cst_10 [1] : vector<1x256xf32> to vector<1xf32>
    %31 = vector.shape_cast %30 : vector<1xf32> to vector<1x1xf32>
    %32 = arith.extui %26 : vector<1x256xi1> to vector<1x256xi32>
    %cst_11 = arith.constant dense<0> : vector<1xi32>
    %33 = vector.multi_reduction <add>, %32, %cst_11 [1] : vector<1x256xi32> to vector<1xi32>
    %34 = vector.shape_cast %33 : vector<1xi32> to vector<1x1xi32>
    %c0_12 = arith.constant 0 : index
    %c0_13 = arith.constant 0 : index
    %c0_14 = arith.constant 0 : index
    %35 = vector.load %arg5[%c0_12, %c0_13, %c0_14] : memref<1x1x1xf32, #tpu.memory_space<vmem>>, vector<1x1x1xf32>
    %36 = vector.shape_cast %31 : vector<1x1xf32> to vector<1x1x1xf32>
    %37 = arith.addf %35, %36 : vector<1x1x1xf32>
    %c0_15 = arith.constant 0 : index
    %c0_16 = arith.constant 0 : index
    %c0_17 = arith.constant 0 : index
    %38 = vector.load %arg5[%c0_15, %c0_16, %c0_17] : memref<1x1x1xf32, #tpu.memory_space<vmem>>, vector<1x1x1xf32>
    tpu.vector_store %arg5[%c0_15, %c0_16, %c0_17], %37 {strides = array<i32>} : memref<1x1x1xf32, #tpu.memory_space<vmem>>, vector<1x1x1xf32>,
    %c0_18 = arith.constant 0 : index
    %c0_19 = arith.constant 0 : index
    %c0_20 = arith.constant 0 : index
    %39 = vector.load %arg6[%c0_18, %c0_19, %c0_20] : memref<1x1x1xi32, #tpu.memory_space<vmem>>, vector<1x1x1xi32>
    %40 = vector.shape_cast %34 : vector<1x1xi32> to vector<1x1x1xi32>
    %41 = arith.addi %39, %40 : vector<1x1x1xi32>
    %c0_21 = arith.constant 0 : index
    %c0_22 = arith.constant 0 : index
    %c0_23 = arith.constant 0 : index
    %42 = vector.load %arg6[%c0_21, %c0_22, %c0_23] : memref<1x1x1xi32, #tpu.memory_space<vmem>>, vector<1x1x1xi32>
    tpu.vector_store %arg6[%c0_21, %c0_22, %c0_23], %41 {strides = array<i32>} : memref<1x1x1xi32, #tpu.memory_space<vmem>>, vector<1x1x1xi32>,
    return
  }
  func.func @transform_0(%arg0: i32, %arg1: i32, %arg2: i32) -> (i32, i32, i32) {
    %c1_i32 = arith.constant 1 : i32
    %0 = arith.muli %arg1, %c1_i32 : i32
    %1 = arith.addi %0, %arg2 : i32
    %c0_i32 = arith.constant 0 : i32
    %2 = arith.minsi %1, %c0_i32 : i32
    %c0_i32_0 = arith.constant 0 : i32
    %c0_i32_1 = arith.constant 0 : i32
    return %arg0, %c0_i32_0, %2 : i32, i32, i32
  }
  func.func @transform_1(%arg0: i32, %arg1: i32, %arg2: i32) -> (i32, i32, i32) {
    %c1_i32 = arith.constant 1 : i32
    %0 = arith.muli %arg1, %c1_i32 : i32
    %1 = arith.addi %0, %arg2 : i32
    %c0_i32 = arith.constant 0 : i32
    %2 = arith.minsi %1, %c0_i32 : i32
    %c0_i32_0 = arith.constant 0 : i32
    %c0_i32_1 = arith.constant 0 : i32
    return %arg0, %c0_i32_0, %2 : i32, i32, i32
  }
  func.func @transform_2(%arg0: i32, %arg1: i32, %arg2: i32) -> (i32, i32, i32) {
    %c0_i32 = arith.constant 0 : i32
    %c0_i32_0 = arith.constant 0 : i32
    return %arg0, %arg1, %c0_i32 : i32, i32, i32
  }
  func.func @transform_3(%arg0: i32, %arg1: i32, %arg2: i32) -> (i32, i32, i32) {
    %c0_i32 = arith.constant 0 : i32
    %c0_i32_0 = arith.constant 0 : i32
    return %arg0, %arg1, %c0_i32 : i32, i32, i32
  }
}

</mosaic_0001>

<llo_original>
// kernel: cross_entropy_loss_2d.1
$region0: #{cross_entropy_loss_2d.1}
  #allocation0 [shape = 'u32[]', space=smem, size = 0x4, offset = 0x4, fixed_abs, tag = 'smem constant byte address 0x4 - core index']
  #allocation1 [shape = 'u32[72,128]{1,0:T(1,128)}', space=vmem, size = 0x9000, scoped, tag = 'internal scratch']
  %s0 = inlined_call_operand.vmem [shape: f32[2,4,256], index: 0, kind: input, shape index: {}]
  %s1 = inlined_call_operand.vmem [shape: s32[2,1,256], index: 1, kind: input, shape index: {}]
  %s2 = inlined_call_operand.vmem [shape: f32[2,1,1], index: 2, kind: output, shape index: {0}]
  %s3 = inlined_call_operand.vmem [shape: s32[2,1,1], index: 3, kind: output, shape index: {1}]
  %4 = xla_tuple %s2, %s3
  %s5 = sld [smem:[#allocation0]]
  $region53: #{cross_entropy_loss_2d.1} parent=0
    _
  %s7 = ssub.s32 1, %s5
  %s8 = scalar_select 0, %s7, %s5
  loop: start=0, step=1, limit=4
  $region2: #{cross_entropy_loss_2d.1} parent=0 // loop_pre_header
    _
  $region3: #{cross_entropy_loss_2d.1} parent=0 // loop_header
    %s10 = sphi 0, %s14
    %p11 = scmp.ge.s32.totalorder %s10, 4
    %s17 = sphi 0, %s36
    %s18 = sphi 0, %s32
    %s19 = sphi 0, %s28
    %s20 = sphi 0, %s17
    %s21 = sphi 0, %s18
    %s22 = sphi 0, %s19
    %s23 = sphi 0, %s20
    %s24 = sphi 0, %s21
    %s25 = sphi 0, %s22
    %s47 = sphi 0, %s49
    %s50 = sphi 0, %s47
    %s51 = sphi 0, %s50
    %s67 = sphi 0, %s51
    %s81 = sphi 0, %s83
    %s84 = sphi 0, %s81
    %s85 = sphi 0, %s84
    %s101 = sphi 0, %s85
    %s109 = sphi 0, %s111
    %s112 = sphi 0, %s109
    %s113 = sphi 0, %s112
    %s129 = sphi 0, %s113
    %s137 = sphi 0, %s139
    %s140 = sphi 0, %s137
    %s141 = sphi 0, %s140
    %s157 = sphi 0, %s141
  $region4: #{cross_entropy_loss_2d.1} parent=0 // loop_header_branch
    %13 = sbr.rel (%p11) target = $region8
  $region5: #{cross_entropy_loss_2d.1} parent=0 // loop_body
    %s15 = ssub.s32 %s10, 1
    %s16 = ssub.s32 %s10, 2
    %s26 = sadd.s32 1, %s19
    %p27 = scmp.ge.s32.totalorder %s26, 1
    %s28 = scalar_select %p27, 0, %s26
    %s29 = sadd.s32 1, %s18
    %s30 = scalar_select %p27, %s29, %s18
    %p31 = scmp.ge.s32.totalorder %s30, 1
    %s32 = scalar_select %p31, 0, %s30
    %s33 = sadd.s32 1, %s17
    %s34 = scalar_select %p31, %s33, %s17
    %p35 = scmp.ge.s32.totalorder %s34, 2
    %s36 = scalar_select %p35, 0, %s34
    %s37 = sadd.s32 %s18, %s19
    %p38 = scmp.lt.s32.totalorder %s37, 0
    %s39 = scalar_select %p38, %s37, 0
    %s40 = sadd.s32 %s32, %s28
    %p41 = scmp.lt.s32.totalorder %s40, 0
    %s42 = scalar_select %p41, %s40, 0
    %s43 = ssub.s32 %s17, %s36
    %s44 = ssub.s32 %s39, %s42
    %s45 = sor.u32 %s43, %s44
    %p46 = scmp.eq.s32.totalorder %s45, 0
    %s48 = sadd.s32 %s47, 1
    %s49 = scalar_select %p46, %s47, %s48
    %p52 = pneg %p46
    %p53 = scmp.eq.s32.totalorder %s10, 1
    %p54 = por %p52, %p53
    %p55 = scmp.ne.s32.totalorder %s47, %s50
    %p56 = scmp.eq.s32.totalorder %s10, 0
    %p57 = por %p55, %p56
    %p58 = scmp.ne.s32.totalorder %s47, %s50
    %p59 = scmp.eq.s32.totalorder %s15, 1
    %p60 = por %p58, %p59
    %p61 = scmp.ne.s32.totalorder %s50, %s51
    %p62 = scmp.eq.s32.totalorder %s15, 0
    %p63 = por %p61, %p62
    %p64 = scmp.ne.s32.totalorder %s50, %s51
    %p65 = scmp.eq.s32.totalorder %s16, 1
    %p66 = por %p64, %p65
    %p68 = scmp.ne.s32.totalorder %s51, %s67
    %p69 = scmp.eq.s32.totalorder %s16, 0
    %p70 = por %p68, %p69
    %s71 = sadd.s32 %s18, %s19
    %p72 = scmp.lt.s32.totalorder %s71, 0
    %s73 = scalar_select %p72, %s71, 0
    %s74 = sadd.s32 %s32, %s28
    %p75 = scmp.lt.s32.totalorder %s74, 0
    %s76 = scalar_select %p75, %s74, 0
    %s77 = ssub.s32 %s17, %s36
    %s78 = ssub.s32 %s73, %s76
    %s79 = sor.u32 %s77, %s78
    %p80 = scmp.eq.s32.totalorder %s79, 0
    %s82 = sadd.s32 %s81, 1
    %s83 = scalar_select %p80, %s81, %s82
    %p86 = pneg %p80
    %p87 = scmp.eq.s32.totalorder %s10, 1
    %p88 = por %p86, %p87
    %p89 = scmp.ne.s32.totalorder %s81, %s84
    %p90 = scmp.eq.s32.totalorder %s10, 0
    %p91 = por %p89, %p90
    %p92 = scmp.ne.s32.totalorder %s81, %s84
    %p93 = scmp.eq.s32.totalorder %s15, 1
    %p94 = por %p92, %p93
    %p95 = scmp.ne.s32.totalorder %s84, %s85
    %p96 = scmp.eq.s32.totalorder %s15, 0
    %p97 = por %p95, %p96
    %p98 = scmp.ne.s32.totalorder %s84, %s85
    %p99 = scmp.eq.s32.totalorder %s16, 1
    %p100 = por %p98, %p99
    %p102 = scmp.ne.s32.totalorder %s85, %s101
    %p103 = scmp.eq.s32.totalorder %s16, 0
    %p104 = por %p102, %p103
    %s105 = ssub.s32 %s17, %s36
    %s106 = ssub.s32 %s18, %s32
    %s107 = sor.u32 %s105, %s106
    %p108 = scmp.eq.s32.totalorder %s107, 0
    %s110 = sadd.s32 %s109, 1
    %s111 = scalar_select %p108, %s109, %s110
    %p114 = pneg %p108
    %p115 = scmp.eq.s32.totalorder %s10, 1
    %p116 = por %p114, %p115
    %p117 = scmp.ne.s32.totalorder %s109, %s112
    %p118 = scmp.eq.s32.totalorder %s10, 0
    %p119 = por %p117, %p118
    %p120 = scmp.ne.s32.totalorder %s109, %s112
    %p121 = scmp.eq.s32.totalorder %s15, 1
    %p122 = por %p120, %p121
    %p123 = scmp.ne.s32.totalorder %s112, %s113
    %p124 = scmp.eq.s32.totalorder %s15, 0
    %p125 = por %p123, %p124
    %p126 = scmp.ne.s32.totalorder %s112, %s113
    %p127 = scmp.eq.s32.totalorder %s16, 1
    %p128 = por %p126, %p127
    %p130 = scmp.ne.s32.totalorder %s113, %s129
    %p131 = scmp.eq.s32.totalorder %s16, 0
    %p132 = por %p130, %p131
    %s133 = ssub.s32 %s17, %s36
    %s134 = ssub.s32 %s18, %s32
    %s135 = sor.u32 %s133, %s134
    %p136 = scmp.eq.s32.totalorder %s135, 0
    %s138 = sadd.s32 %s137, 1
    %s139 = scalar_select %p136, %s137, %s138
    %p142 = pneg %p136
    %p143 = scmp.eq.s32.totalorder %s10, 1
    %p144 = por %p142, %p143
    %p145 = scmp.ne.s32.totalorder %s137, %s140
    %p146 = scmp.eq.s32.totalorder %s10, 0
    %p147 = por %p145, %p146
    %p148 = scmp.ne.s32.totalorder %s137, %s140
    %p149 = scmp.eq.s32.totalorder %s15, 1
    %p150 = por %p148, %p149
    %p151 = scmp.ne.s32.totalorder %s140, %s141
    %p152 = scmp.eq.s32.totalorder %s15, 0
    %p153 = por %p151, %p152
    %p154 = scmp.ne.s32.totalorder %s140, %s141
    %p155 = scmp.eq.s32.totalorder %s16, 1
    %p156 = por %p154, %p155
    %p158 = scmp.ne.s32.totalorder %s141, %s157
    %p159 = scmp.eq.s32.totalorder %s16, 0
    %p160 = por %p158, %p159
    %p161 = scmp.le.s32.totalorder 1, %s10
    %p162 = scmp.lt.s32.totalorder %s10, 3
    %p163 = pnand %p161, %p162
    %p164 = pneg %p163
    // Predicated region
    $region9: #{cross_entropy_loss_2d.1} parent=5 // pred_check
      _
    $region10: #{cross_entropy_loss_2d.1} parent=5 // pred_check_branch
      %166 = sbr.rel (%p163) target = $region12
    $region11: #{cross_entropy_loss_2d.1} parent=5 // pred_region
      %s167 = ssub.s32 %s10, 1
    $region12: #{cross_entropy_loss_2d.1} parent=5 // pred_fallthru
      _
    %p168 = scmp.lt.s32.totalorder %s10, 2
    // Predicated region
    $region13: #{cross_entropy_loss_2d.1} parent=5 // pred_check
      %p169 = pneg %p168
    $region14: #{cross_entropy_loss_2d.1} parent=5 // pred_check_branch
      %171 = sbr.rel (%p169) target = $region16
    $region15: #{cross_entropy_loss_2d.1} parent=5 // pred_region
      // Predicated region
      $region17: #{cross_entropy_loss_2d.1} parent=15 // pred_check
        %p172 = pneg %p57
      $region18: #{cross_entropy_loss_2d.1} parent=15 // pred_check_branch
        %174 = sbr.rel (%p172) target = $region20
      $region19: #{cross_entropy_loss_2d.1} parent=15 // pred_region
        %s175 = sadd.s32 %s18, %s19
        %p176 = scmp.lt.s32.totalorder %s175, 0
        %s177 = scalar_select %p176, %s175, 0
        %s178 = smul.u32 2, %s177
        %p179 = scmp.lt.s32.totalorder %s17, 1
        %s180 = scalar_select %p179, %s17, 1
        %p181 = scmp.lt.s32.totalorder %s178, 1
        %s182 = scalar_select %p181, %s178, 1
        %s183 = smul.addr %s180, 2
        %s184 = sadd.s32 %s182, %s183
        %s185 = smul.addr %s184, 4
        %s186 = scalar_lea.vmem %s0, %s185
        %s187 = sadd.s32 %s18, %s19
        %p188 = scmp.lt.s32.totalorder %s187, 0
        %s189 = scalar_select %p188, %s187, 0
        %s190 = smul.u32 2, %s189
      $region20: #{cross_entropy_loss_2d.1} parent=15 // pred_fallthru
        _
      // Predicated region
      $region21: #{cross_entropy_loss_2d.1} parent=15 // pred_check
        %p191 = pneg %p91
      $region22: #{cross_entropy_loss_2d.1} parent=15 // pred_check_branch
        %193 = sbr.rel (%p191) target = $region24
      $region23: #{cross_entropy_loss_2d.1} parent=15 // pred_region
        %s194 = sadd.s32 %s18, %s19
        %p195 = scmp.lt.s32.totalorder %s194, 0
        %s196 = scalar_select %p195, %s194, 0
        %s197 = smul.u32 2, %s196
        %p198 = scmp.lt.s32.totalorder %s17, 1
        %s199 = scalar_select %p198, %s17, 1
        %p200 = scmp.lt.s32.totalorder %s197, 1
        %s201 = scalar_select %p200, %s197, 1
        %s202 = smul.addr %s199, 2
        %s203 = sadd.s32 %s201, %s202
        %s204 = scalar_lea.vmem %s1, %s203
        %s205 = sadd.s32 %s18, %s19
        %p206 = scmp.lt.s32.totalorder %s205, 0
        %s207 = scalar_select %p206, %s205, 0
        %s208 = smul.u32 2, %s207
      $region24: #{cross_entropy_loss_2d.1} parent=15 // pred_fallthru
        _
    $region16: #{cross_entropy_loss_2d.1} parent=5 // pred_fallthru
      _
    %p209 = scmp.le.s32.totalorder 1, %s10
    %p210 = scmp.lt.s32.totalorder %s10, 3
    %p211 = pnand %p209, %p210
    %p212 = pneg %p211
    // Predicated region
    $region25: #{cross_entropy_loss_2d.1} parent=5 // pred_check
      _
    $region26: #{cross_entropy_loss_2d.1} parent=5 // pred_check_branch
      %214 = sbr.rel (%p211) target = $region28
    $region27: #{cross_entropy_loss_2d.1} parent=5 // pred_region
      %s215 = ssub.s32 %s10, 1
      %s216 = sadd.s32 %s21, %s22
      %p217 = scmp.lt.s32.totalorder %s216, 0
      %s218 = scalar_select %p217, %s216, 0
      %s219 = smul.u32 2, %s218
      %p220 = scmp.lt.s32.totalorder %s20, 1
      %s221 = scalar_select %p220, %s20, 1
      %p222 = scmp.lt.s32.totalorder %s219, 1
      %s223 = scalar_select %p222, %s219, 1
      %s224 = smul.addr %s221, 2
      %s225 = sadd.s32 %s223, %s224
      %s226 = smul.addr %s225, 4
      %s227 = scalar_lea.vmem %s0, %s226
      %p228 = pneg %p63
      %p229 = pneg %p60
      %s230 = sadd.s32 %s21, %s22
      %p231 = scmp.lt.s32.totalorder %s230, 0
      %s232 = scalar_select %p231, %s230, 0
      %s233 = smul.u32 2, %s232
      %p234 = scmp.lt.s32.totalorder %s20, 1
      %s235 = scalar_select %p234, %s20, 1
      %p236 = scmp.lt.s32.totalorder %s233, 1
      %s237 = scalar_select %p236, %s233, 1
      %s238 = smul.addr %s235, 2
      %s239 = sadd.s32 %s237, %s238
      %s240 = scalar_lea.vmem %s1, %s239
      %p241 = pneg %p97
      %p242 = pneg %p94
      %p243 = pneg %p125
      %p244 = pneg %p122
      %p245 = scmp.lt.s32.totalorder %s20, 1
      %s246 = scalar_select %p245, %s20, 1
      %p247 = scmp.lt.s32.totalorder %s21, 0
      %s248 = scalar_select %p247, %s21, 0
      %s249 = sadd.s32 %s248, %s246
      %s250 = scalar_lea.vmem %s2, %s249
      %p251 = pneg %p153
      %p252 = pneg %p150
      %p253 = scmp.lt.s32.totalorder %s20, 1
      %s254 = scalar_select %p253, %s20, 1
      %p255 = scmp.lt.s32.totalorder %s21, 0
      %s256 = scalar_select %p255, %s21, 0
      %s257 = sadd.s32 %s256, %s254
      %s258 = scalar_lea.vmem %s3, %s257
      %s259 = sadd.s32 %s21, %s22
      %p260 = scmp.lt.s32.totalorder %s259, 0
      %s261 = scalar_select %p260, %s259, 0
      %s262 = smul.u32 2, %s261
      %p263 = scmp.lt.s32.totalorder %s20, 1
      %s264 = scalar_select %p263, %s20, 1
      %p265 = scmp.lt.s32.totalorder %s262, 1
      %s266 = scalar_select %p265, %s262, 1
      %s267 = smul.addr %s264, 2
      %s268 = sadd.s32 %s266, %s267
      %s269 = smul.addr %s268, 4
      %s270 = scalar_lea.vmem %s0, %s269
      %s271 = sadd.s32 %s21, %s22
      %p272 = scmp.lt.s32.totalorder %s271, 0
      %s273 = scalar_select %p272, %s271, 0
      %s274 = smul.u32 2, %s273
      %s275 = sadd.s32 %s21, %s22
      %p276 = scmp.lt.s32.totalorder %s275, 0
      %s277 = scalar_select %p276, %s275, 0
      %s278 = smul.u32 2, %s277
      %p279 = scmp.lt.s32.totalorder %s20, 1
      %s280 = scalar_select %p279, %s20, 1
      %p281 = scmp.lt.s32.totalorder %s278, 1
      %s282 = scalar_select %p281, %s278, 1
      %s283 = smul.addr %s280, 2
      %s284 = sadd.s32 %s282, %s283
      %s285 = scalar_lea.vmem %s1, %s284
      %s286 = sadd.s32 %s21, %s22
      %p287 = scmp.lt.s32.totalorder %s286, 0
      %s288 = scalar_select %p287, %s286, 0
      %s289 = smul.u32 2, %s288
      %p290 = scmp.lt.s32.totalorder %s20, 1
      %s291 = scalar_select %p290, %s20, 1
      %p292 = scmp.lt.s32.totalorder %s21, 0
      %s293 = scalar_select %p292, %s21, 0
      %s294 = sadd.s32 %s293, %s291
      %s295 = scalar_lea.vmem %s2, %s294
      %p296 = scmp.lt.s32.totalorder %s20, 1
      %s297 = scalar_select %p296, %s20, 1
      %p298 = scmp.lt.s32.totalorder %s21, 0
      %s299 = scalar_select %p298, %s21, 0
      %s300 = sadd.s32 %s299, %s297
      %s301 = scalar_lea.vmem %s3, %s300
      %p302 = scmp.eq.s32.totalorder %s22, 0
      // Predicated region
      $region29: #{cross_entropy_loss_2d.1} parent=27 // pred_check
        %p303 = pneg %p302
      $region30: #{cross_entropy_loss_2d.1} parent=27 // pred_check_branch
        %305 = sbr.rel (%p303) target = $region32
      $region31: #{cross_entropy_loss_2d.1} parent=27 // pred_region
        %vm306 = vcmask 0
        %307 = vst.msk [vmem:[%s295] sm:$0x1] %vm306, 0.0
        %308 = vst.msk [vmem:[%s301] sm:$0x1] %vm306, 0
      $region32: #{cross_entropy_loss_2d.1} parent=27 // pred_fallthru
        _
      %v309 = vld [vmem:[%s270] sm:$0xff]
      %v310 = vld [vmem:[%s285] sm:$0x3]
      %312 = vst [vmem:[#allocation1] ss:$2 sm:$0xff] %v309
      %v313 = vld.sshfl [vmem:[#allocation1] sm:$0xff pattern:$0x75316420]
      %v314 = vld.sshfl [vmem:[#allocation1 + $0x8] sm:$0xff pattern:$0x75316420]
      %vm317 = vcmask 1043456
      %v318 = vsel %vm317, %v313, -inf
      %v319 = vrot.slane %v318, 4
      %v320 = vmax.f32 %v318, %v319
      %v321 = vrot.slane %v320, 2
      %v322 = vmax.f32 %v320, %v321
      %v323 = vrot.slane %v322, 1
      %v324 = vmax.f32 %v322, %v323
      %v325 = vsel %vm317, %v314, -inf
      %v326 = vrot.slane %v325, 4
      %v327 = vmax.f32 %v325, %v326
      %v328 = vrot.slane %v327, 2
      %v329 = vmax.f32 %v327, %v328
      %v330 = vrot.slane %v329, 1
      %v331 = vmax.f32 %v329, %v330
      %v334 = vrot.slane %v331, 4
      %v335 = vsel %vm317, %v324, %v334
      %v337 = vsub.f32 %v309, %v335
      %v338 = vmul.f32 %v337, 1.442695
      %v339 = vpow.pop %v338
      %341 = vst [vmem:[#allocation1] ss:$2 sm:$0xff] %v339
      %v342 = vld.sshfl [vmem:[#allocation1] sm:$0xff pattern:$0x75316420]
      %v343 = vld.sshfl [vmem:[#allocation1 + $0x8] sm:$0xff pattern:$0x75316420]
      %v346 = vsel %vm317, %v342, 0.0
      %v347 = vrot.slane %v346, 4
      %v348 = vadd.f32 %v346, %v347
      %v349 = vrot.slane %v348, 2
      %v350 = vadd.f32 %v348, %v349
      %v351 = vrot.slane %v350, 1
      %v352 = vadd.f32 %v350, %v351
      %v353 = vsel %vm317, %v343, 0.0
      %v354 = vrot.slane %v353, 4
      %v355 = vadd.f32 %v353, %v354
      %v356 = vrot.slane %v355, 2
      %v357 = vadd.f32 %v355, %v356
      %v358 = vrot.slane %v357, 1
      %v359 = vadd.f32 %v357, %v358
      %v360 = vlog2.pop %v352
      %v361 = vmul.f32 %v360, 0.6931472
      %v362 = vlog2.pop %v359
      %v363 = vmul.f32 %v362, 0.6931472
      %v364 = vadd.f32 %v361, %v324
      %v365 = vadd.f32 %v363, %v331
      %v366 = vlaneseq
      %v367 = vshrl.u32 %v366, 7
      %v368 = vperm.slane %v310, 0
      %v369 = vperm.slane %v310, 1
      %vm370 = vcmp.eq.s32.totalorder %v367, %v368
      %vm371 = vcmp.eq.s32.totalorder %v367, %v369
      %372 = vst [vmem:[#allocation1] ss:$2 sm:$0xff] %v309
      %v373 = vld.sshfl [vmem:[#allocation1] sm:$0xff pattern:$0x75316420]
      %v374 = vld.sshfl [vmem:[#allocation1 + $0x8] sm:$0xff pattern:$0x75316420]
      %v377 = vsel %vm370, %v373, 0.0
      %v378 = vsel %vm371, %v374, 0.0
      %v379 = vsel %vm317, %v377, 0.0
      %v380 = vrot.slane %v379, 4
      %v381 = vadd.f32 %v379, %v380
      %v382 = vrot.slane %v381, 2
      %v383 = vadd.f32 %v381, %v382
      %v384 = vrot.slane %v383, 1
      %v385 = vadd.f32 %v383, %v384
      %v386 = vsel %vm317, %v378, 0.0
      %v387 = vrot.slane %v386, 4
      %v388 = vadd.f32 %v386, %v387
      %v389 = vrot.slane %v388, 2
      %v390 = vadd.f32 %v388, %v389
      %v391 = vrot.slane %v390, 1
      %v392 = vadd.f32 %v390, %v391
      %vm393 = vcmp.ne.s32.totalorder %v310, 4294967295
      %v394 = vsub.f32 %v364, %v385
      %v395 = vsub.f32 %v365, %v392
      %v398 = vrot.slane %v395, 7
      %vm399 = vcmask 1040384
      %v400 = vsel %vm399, %v394, %v398
      %v402 = vsel %vm393, %v400, 0.0
      %v404 = vperm.slane %v402, 0
      %v405 = vperm.slane %v402, 1
      %v408 = vsel %vm399, %v404, 0.0
      %v409 = vsel %vm399, %v405, 0.0
      %v410 = vadd.f32 %v408, %v409
      %411 = vadd.xlane.f32.xlu0 %v410
      %v412 = vpop.xlane.xlu0 %411
      %v413 = vsel %vm393, 1, 0
      %v414 = vperm.slane %v413, 0
      %v415 = vperm.slane %v413, 1
      %v416 = vsel %vm399, %v414, 0
      %v417 = vsel %vm399, %v415, 0
      %v418 = vadd.s32 %v416, %v417
      %v419 = vand.u32 %v418, 65535
      %v420 = vshrl.u32 %v418, 16
      %v421 = vcvt.s32.f32 %v419
      %v422 = vcvt.s32.f32 %v420
      %423 = vadd.xlane.f32.xlu0 %v421
      %v424 = vpop.xlane.xlu0 %423
      %425 = vadd.xlane.f32.xlu0 %v422
      %v426 = vpop.xlane.xlu0 %425
      %v427 = vcvt.f32.s32 %v424
      %v428 = vcvt.f32.s32 %v426
      %v429 = vshll.u32 %v428, 16
      %v430 = vadd.s32 %v429, %v427
      %v431 = vld [vmem:[%s295] sm:$0x1]
      %v432 = vadd.f32 %v431, %v412
      %vm433 = vcmask 0
      %434 = vst.msk [vmem:[%s295] sm:$0x1] %vm433, %v432
      %v435 = vld [vmem:[%s301] sm:$0x1]
      %v436 = vadd.s32 %v435, %v430
      %437 = vst.msk [vmem:[%s301] sm:$0x1] %vm433, %v436
      %p438 = scmp.lt.s32.totalorder %s20, 1
      %s439 = scalar_select %p438, %s20, 1
      %p440 = scmp.lt.s32.totalorder %s21, 0
      %s441 = scalar_select %p440, %s21, 0
      %s442 = sadd.s32 %s441, %s439
      %s443 = scalar_lea.vmem %s2, %s442
      %p444 = scmp.lt.s32.totalorder %s20, 1
      %s445 = scalar_select %p444, %s20, 1
      %p446 = scmp.lt.s32.totalorder %s21, 0
      %s447 = scalar_select %p446, %s21, 0
      %s448 = sadd.s32 %s447, %s445
      %s449 = scalar_lea.vmem %s3, %s448
      // Predicated region
      $region33: #{cross_entropy_loss_2d.1} parent=27 // pred_check
        %p450 = pneg %p122
      $region34: #{cross_entropy_loss_2d.1} parent=27 // pred_check_branch
        %452 = sbr.rel (%p450) target = $region36
      $region35: #{cross_entropy_loss_2d.1} parent=27 // pred_region
        _
      $region36: #{cross_entropy_loss_2d.1} parent=27 // pred_fallthru
        _
      // Predicated region
      $region37: #{cross_entropy_loss_2d.1} parent=27 // pred_check
        %p453 = pneg %p150
      $region38: #{cross_entropy_loss_2d.1} parent=27 // pred_check_branch
        %455 = sbr.rel (%p453) target = $region40
      $region39: #{cross_entropy_loss_2d.1} parent=27 // pred_region
        _
      $region40: #{cross_entropy_loss_2d.1} parent=27 // pred_fallthru
        _
    $region28: #{cross_entropy_loss_2d.1} parent=5 // pred_fallthru
      _
    %p456 = scmp.le.s32.totalorder 2, %s10
    // Predicated region
    $region41: #{cross_entropy_loss_2d.1} parent=5 // pred_check
      %p457 = pneg %p456
    $region42: #{cross_entropy_loss_2d.1} parent=5 // pred_check_branch
      %459 = sbr.rel (%p457) target = $region44
    $region43: #{cross_entropy_loss_2d.1} parent=5 // pred_region
      %s460 = ssub.s32 %s10, 2
      // Predicated region
      $region45: #{cross_entropy_loss_2d.1} parent=43 // pred_check
        %p461 = pneg %p128
      $region46: #{cross_entropy_loss_2d.1} parent=43 // pred_check_branch
        %463 = sbr.rel (%p461) target = $region48
      $region47: #{cross_entropy_loss_2d.1} parent=43 // pred_region
        %p464 = scmp.lt.s32.totalorder %s23, 1
        %s465 = scalar_select %p464, %s23, 1
        %p466 = scmp.lt.s32.totalorder %s24, 0
        %s467 = scalar_select %p466, %s24, 0
        %s468 = sadd.s32 %s467, %s465
        %s469 = scalar_lea.vmem %s2, %s468
      $region48: #{cross_entropy_loss_2d.1} parent=43 // pred_fallthru
        _
      // Predicated region
      $region49: #{cross_entropy_loss_2d.1} parent=43 // pred_check
        %p470 = pneg %p156
      $region50: #{cross_entropy_loss_2d.1} parent=43 // pred_check_branch
        %472 = sbr.rel (%p470) target = $region52
      $region51: #{cross_entropy_loss_2d.1} parent=43 // pred_region
        %p473 = scmp.lt.s32.totalorder %s23, 1
        %s474 = scalar_select %p473, %s23, 1
        %p475 = scmp.lt.s32.totalorder %s24, 0
        %s476 = scalar_select %p475, %s24, 0
        %s477 = sadd.s32 %s476, %s474
        %s478 = scalar_lea.vmem %s3, %s477
      $region52: #{cross_entropy_loss_2d.1} parent=43 // pred_fallthru
        _
    $region44: #{cross_entropy_loss_2d.1} parent=5 // pred_fallthru
      _
  $region6: #{cross_entropy_loss_2d.1} parent=0 // loop_footer
    %s14 = sadd.s32 1, %s10
  $region7: #{cross_entropy_loss_2d.1} parent=0 // loop_footer_branch
    %9 = sbr.rel target = $region3
  $region8: #{cross_entropy_loss_2d.1} parent=0 // loop_exit
    _

</llo_original>
